<compile_context>
chip_gen: v7x
topology: tpu7x:2x2x1
jax: 0.10.0
libtpu: 0.0.40
codegen_flags: <defaults>
</compile_context>

<pallas_src>
import functools

import jax
import jax.numpy as jnp
from jax.experimental import pallas as pl
from jax.experimental.pallas import tpu as pltpu


def pagnn_kernel(adj_ref, rhs_ref, w_ref, b_ref, out_ref, acc_ref, *, f_in):
    """Grid = (row tiles of A, k tiles of the contraction)."""
    k = pl.program_id(1)

    @pl.when(k == 0)
    def _():
        acc_ref[...] = jnp.zeros_like(acc_ref)

    # One fused MXU pass per (tm, tk) adj tile:
    #   rhs = [mask | mask*x | 1]  ->  acc = [A@mask | A@(mask*x) | A@1]
    acc_ref[...] += jnp.dot(adj_ref[...], rhs_ref[...],
                            preferred_element_type=jnp.float32)

    @pl.when(k == pl.num_programs(1) - 1)
    def _():
        acc = acc_ref[...]                        # (tm, 2*F_in + 1) f32
        s2 = acc[:, :f_in]                        # A @ mask        (denominator)
        s1 = acc[:, f_in:2 * f_in]                # A @ (mask * x)
        rowsum = acc[:, 2 * f_in:2 * f_in + 1]    # A @ ones        (tm, 1)
        # nan->0, +/-inf -> f32 max/min (matches torch.nan_to_num defaults).
        ratio = jnp.nan_to_num((rowsum * s1) / s2)
        out = jnp.dot(ratio, w_ref[...],
                      preferred_element_type=jnp.float32) + b_ref[...]
        out_ref[...] = out.astype(out_ref.dtype)


def pagnn_conv(adj, mask, x, w_t, b, *, tm=1024, tk=2048,
               stream_dtype=jnp.bfloat16, adj_buffers=2,
               vmem_limit_bytes=48 * 1024 * 1024):
    """adj: (N, N), mask/x: (N, F_in), w_t: (F_in, F_out), b: (1, F_out)."""
    N, f_in = x.shape
    f_out = w_t.shape[1]
    tm = min(tm, N)
    tk = min(tk, N)
    assert N % tm == 0 and N % tk == 0, "pad N to a multiple of the tile sizes"

    # Hoisted elementwise prep: zero the NaNs and build ONE fused RHS slab
    #   [mask | mask * x | 1]   (N, 2*F_in + 1)
    # so the kernel does a single wide adj matmul per step and the row-sum of
    # A falls out of the last accumulator column for free.
    x_clean = jnp.where(jnp.isnan(x), jnp.zeros_like(x), x)   # x[x.isnan()] = 0
    rhs = jnp.concatenate(
        [mask, mask * x_clean, jnp.ones((N, 1), x.dtype)], axis=1)

    # Stream the dominant N^2 operand (and the small RHS) in a narrow dtype;
    # accumulation and finalize math stay f32.
    adj_s = adj.astype(stream_dtype)
    rhs_s = rhs.astype(stream_dtype)
    w_f32 = w_t.astype(jnp.float32)
    b_f32 = b.astype(jnp.float32)
    rhs_w = 2 * f_in + 1

    adj_spec_kwargs = {}
    if adj_buffers > 2:   # deepen only the dominant stream if DMA is exposed
        adj_spec_kwargs["pipeline_mode"] = pl.Buffered(adj_buffers)

    grid = (N // tm, N // tk)
    return pl.pallas_call(
        functools.partial(pagnn_kernel, f_in=f_in),
        out_shape=jax.ShapeDtypeStruct((N, f_out), jnp.float32),
        grid_spec=pltpu.PrefetchScalarGridSpec(
            num_scalar_prefetch=0,
            grid=grid,
            in_specs=[
                pl.BlockSpec((tm, tk), lambda i, k: (i, k),
                             **adj_spec_kwargs),                    # adj tile
                pl.BlockSpec((tk, rhs_w), lambda i, k: (k, 0)),     # fused RHS
                pl.BlockSpec((f_in, f_out), lambda i, k: (0, 0)),   # W^T (full)
                pl.BlockSpec((1, f_out), lambda i, k: (0, 0)),      # bias
            ],
            out_specs=pl.BlockSpec((tm, f_out), lambda i, k: (i, 0)),
            scratch_shapes=[
                pltpu.VMEM((tm, rhs_w), jnp.float32),  # [A@mask | A@(m*x) | A@1]
            ],
        ),
        compiler_params=pltpu.CompilerParams(
            dimension_semantics=("parallel", "arbitrary"),
            # bf16 adj tiles at tm=1024/tk=2048 are 4 MiB (8 MiB double-buffered)
            # plus small RHS/out/acc buffers: comfortably under this cap on
            # v5e/v6e and safely below v7x's 64 MiB physical VMEM.
            vmem_limit_bytes=vmem_limit_bytes,
        ),
    )(adj_s, rhs_s, w_f32, b_f32)


def get_symmetrically_normalized_adjacency(edge_index, n_nodes):
    """Dense JAX equivalent of the torch helper: D^{-1/2} A D^{-1/2}."""
    row, col = edge_index[0], edge_index[1]
    w = jnp.ones(row.shape[0], dtype=jnp.float32)
    deg = jnp.zeros((n_nodes,), jnp.float32).at[col].add(w)
    dinv_sqrt = jnp.where(deg > 0, 1.0 / jnp.sqrt(deg), 0.0)
    vals = dinv_sqrt[row] * w * dinv_sqrt[col]
    adj = jnp.zeros((n_nodes, n_nodes), jnp.float32).at[row, col].add(vals)
    return adj


if __name__ == "__main__":
    N = 256          # number of graph nodes
    F_IN = 32        # in_features
    F_OUT = 32       # out_features

    key = jax.random.PRNGKey(0)
    k_edge, k_x, k_nan, k_mask, k_w, k_b = jax.random.split(key, 6)

    # deterministic synthetic graph: ring edges + random edges, symmetrized
    ring_src = jnp.arange(N, dtype=jnp.int32)
    ring_dst = (ring_src + 1) % N
    rnd_src = jax.random.randint(k_edge, (512,), 0, N, dtype=jnp.int32)
    rnd_dst = jax.random.randint(jax.random.fold_in(k_edge, 1), (512,), 0, N,
                                 dtype=jnp.int32)
    src = jnp.concatenate([ring_src, ring_dst, rnd_src, rnd_dst])
    dst = jnp.concatenate([ring_dst, ring_src, rnd_dst, rnd_src])
    edge_index = jnp.stack([src, dst], axis=0)

    adj = get_symmetrically_normalized_adjacency(edge_index, N)

    # node features with some NaNs injected (forward zeroes them out)
    x = jax.random.normal(k_x, (N, F_IN), dtype=jnp.float32)
    nan_mask = jax.random.bernoulli(k_nan, 0.05, (N, F_IN))
    x = jnp.where(nan_mask, jnp.nan, x)

    # feature-observation mask (float, same shape as x)
    mask = jax.random.bernoulli(k_mask, 0.8, (N, F_IN)).astype(jnp.float32)

    # Linear(in_features, out_features) params, deterministic init
    bound = 1.0 / jnp.sqrt(jnp.float32(F_IN))
    w = jax.random.uniform(k_w, (F_OUT, F_IN), jnp.float32, -bound, bound)
    b = jax.random.uniform(k_b, (F_OUT,), jnp.float32, -bound, bound)
    w_t = w.T                      # [F_in, F_out] for ratio @ W^T
    b2 = b.reshape(1, F_OUT)       # [1, F_out] for TPU-friendly layout

    # tm=tk=128 at N=256 exercises both the parallel row axis and the
    # k-accumulation path (2x2 grid); the defaults (tm=1024, tk=2048, bf16
    # streaming) are sized for production graphs.
    out_bf16 = pagnn_conv(adj, mask, x, w_t, b2, tm=128, tk=128)
    out_bf16 = jax.block_until_ready(out_bf16)
    assert out_bf16.shape == (N, F_OUT) and out_bf16.dtype == jnp.float32

    # Exact-f32 streaming path for the bit-faithful reference comparison.
    out_f32 = pagnn_conv(adj, mask, x, w_t, b2, tm=128, tk=128,
                         stream_dtype=jnp.float32)
    out_f32 = jax.block_until_ready(out_f32)

    # Reference (skip rows whose denominator has exact zeros: those rows carry
    # nan_to_num's ~3.4e38 sentinels through the Linear, where summation order
    # can legitimately differ).
    x_clean = jnp.where(jnp.isnan(x), 0.0, x)

    def reference(adj_op, mask_op, mx_op):
        num = (adj_op @ jnp.ones_like(x_clean)) * (adj_op @ mx_op)
        den = adj_op @ mask_op
        ratio = jnp.nan_to_num(num / den)
        return ratio @ w_t + b2, den

    # f32 streaming vs exact f32 reference.
    ref_f32, den_f32 = reference(adj, mask, mask * x_clean)
    good = jnp.all(den_f32 > 0, axis=1)[:, None]
    assert jnp.allclose(jnp.where(good, out_f32, 0.0),
                        jnp.where(good, ref_f32, 0.0),
                        rtol=1e-3, atol=1e-3)

    # bf16 streaming vs a reference built from the same bf16-cast operands
    # (validates kernel logic; the bf16 quantization itself is the accepted
    # perf/precision tradeoff with f32 accumulation).
    cast = lambda a: a.astype(jnp.bfloat16).astype(jnp.float32)
    ref_bf, den_bf = reference(cast(adj), cast(mask), cast(mask * x_clean))
    good_bf = jnp.all(den_bf > 0, axis=1)[:, None]
    assert jnp.allclose(jnp.where(good_bf, out_bf16, 0.0),
                        jnp.where(good_bf, ref_bf, 0.0),
                        rtol=5e-3, atol=5e-3)

    print("KERNEL_OK")
</pallas_src>

<mosaic_0001>
module attributes {stable_mosaic.version = 11 : i64} {
  func.func @pagnn_kernel(%arg0: i32, %arg1: i32, %arg2: memref<128x128xbf16, #tpu.memory_space<vmem>>, %arg3: memref<128x65xbf16, #tpu.memory_space<vmem>>, %arg4: memref<32x32xf32, #tpu.memory_space<vmem>>, %arg5: memref<1x32xf32, #tpu.memory_space<vmem>>, %arg6: memref<128x32xf32, #tpu.memory_space<vmem>>, %arg7: memref<128x65xf32, #tpu.memory_space<vmem>>) attributes {dimension_semantics = [#tpu.dimension_semantics<parallel>, #tpu.dimension_semantics<arbitrary>], iteration_bounds = array<i64: 2, 2>, scalar_prefetch = 0 : i64, scratch_operands = 1 : i64, tpu.core_type = #tpu.core_type<tc>, window_params = [{transform_indices = @transform_0, window_bounds = array<i64: 128, 128>}, {transform_indices = @transform_1, window_bounds = array<i64: 128, 65>}, {pipeline_mode = #tpu.pipeline_mode<synchronous>, transform_indices = @transform_2, window_bounds = array<i64: 32, 32>}, {pipeline_mode = #tpu.pipeline_mode<synchronous>, transform_indices = @transform_3, window_bounds = array<i64: 1, 32>}, {transform_indices = @transform_4, window_bounds = array<i64: 128, 32>}]} {
    %c0_i32 = arith.constant 0 : i32
    %0 = arith.cmpi eq, %arg1, %c0_i32 : i32
    %1 = arith.extui %0 : i1 to i32
    %c0_i32_0 = arith.constant 0 : i32
    %2 = arith.cmpi ne, %1, %c0_i32_0 : i32
    scf.if %2 {
      %cst_9 = arith.constant 0.000000e+00 : f32
      %12 = vector.broadcast %cst_9 : f32 to vector<128x65xf32>
      %c0_10 = arith.constant 0 : index
      %c0_11 = arith.constant 0 : index
      %13 = vector.load %arg7[%c0_10, %c0_11] : memref<128x65xf32, #tpu.memory_space<vmem>>, vector<128x65xf32>
      tpu.vector_store %arg7[%c0_10, %c0_11], %12 {strides = array<i32>} : memref<128x65xf32, #tpu.memory_space<vmem>>, vector<128x65xf32>,
    } else {
    }
    %c0 = arith.constant 0 : index
    %c0_1 = arith.constant 0 : index
    %3 = vector.load %arg7[%c0, %c0_1] : memref<128x65xf32, #tpu.memory_space<vmem>>, vector<128x65xf32>
    %c0_2 = arith.constant 0 : index
    %c0_3 = arith.constant 0 : index
    %4 = vector.load %arg2[%c0_2, %c0_3] : memref<128x128xbf16, #tpu.memory_space<vmem>>, vector<128x128xbf16>
    %c0_4 = arith.constant 0 : index
    %c0_5 = arith.constant 0 : index
    %5 = vector.load %arg3[%c0_4, %c0_5] : memref<128x65xbf16, #tpu.memory_space<vmem>>, vector<128x65xbf16>
    %cst = arith.constant dense<0.000000e+00> : vector<128x65xf32>
    %6 = tpu.matmul %4, %5, %cst {dimension_numbers = #tpu.dot_dimension_numbers<[1], [0], [0], [1], [0, 0, 1, 1], [], []>} : vector<128x128xbf16>, vector<128x65xbf16>, vector<128x65xf32> -> vector<128x65xf32>
    %7 = arith.addf %3, %6 : vector<128x65xf32>
    %c0_6 = arith.constant 0 : index
    %c0_7 = arith.constant 0 : index
    %8 = vector.load %arg7[%c0_6, %c0_7] : memref<128x65xf32, #tpu.memory_space<vmem>>, vector<128x65xf32>
    tpu.vector_store %arg7[%c0_6, %c0_7], %7 {strides = array<i32>} : memref<128x65xf32, #tpu.memory_space<vmem>>, vector<128x65xf32>,
    %c1_i32 = arith.constant 1 : i32
    %9 = arith.cmpi eq, %arg1, %c1_i32 : i32
    %10 = arith.extui %9 : i1 to i32
    %c0_i32_8 = arith.constant 0 : i32
    %11 = arith.cmpi ne, %10, %c0_i32_8 : i32
    scf.if %11 {
      %c0_9 = arith.constant 0 : index
      %c0_10 = arith.constant 0 : index
      %12 = vector.load %arg7[%c0_9, %c0_10] : memref<128x65xf32, #tpu.memory_space<vmem>>, vector<128x65xf32>
      %13 = vector.extract_strided_slice %12 {offsets = [0, 0], sizes = [128, 32], strides = [1, 1]} : vector<128x65xf32> to vector<128x32xf32>
      %14 = vector.extract_strided_slice %12 {offsets = [0, 32], sizes = [128, 32], strides = [1, 1]} : vector<128x65xf32> to vector<128x32xf32>
      %15 = vector.extract_strided_slice %12 {offsets = [0, 64], sizes = [128, 1], strides = [1, 1]} : vector<128x65xf32> to vector<128x1xf32>
      %16 = vector.broadcast %15 : vector<128x1xf32> to vector<128x32xf32>
      %17 = arith.mulf %16, %14 : vector<128x32xf32>
      %18 = arith.divf %17, %13 : vector<128x32xf32>
      %19 = arith.cmpf one, %18, %18 : vector<128x32xf32>
      %cst_11 = arith.constant 0.000000e+00 : f32
      %20 = vector.broadcast %cst_11 : f32 to vector<128x32xf32>
      %21 = arith.select %19, %20, %18 : vector<128x32xi1>, vector<128x32xf32>
      %cst_12 = arith.constant 0x7F800000 : f32
      %22 = vector.broadcast %cst_12 : f32 to vector<128x32xf32>
      %23 = arith.cmpf oeq, %21, %22 : vector<128x32xf32>
      %cst_13 = arith.constant 3.40282347E+38 : f32
      %24 = vector.broadcast %cst_13 : f32 to vector<128x32xf32>
      %25 = arith.select %23, %24, %21 : vector<128x32xi1>, vector<128x32xf32>
      %cst_14 = arith.constant 0xFF800000 : f32
      %26 = vector.broadcast %cst_14 : f32 to vector<128x32xf32>
      %27 = arith.cmpf oeq, %25, %26 : vector<128x32xf32>
      %cst_15 = arith.constant -3.40282347E+38 : f32
      %28 = vector.broadcast %cst_15 : f32 to vector<128x32xf32>
      %29 = arith.select %27, %28, %25 : vector<128x32xi1>, vector<128x32xf32>
      %c0_16 = arith.constant 0 : index
      %c0_17 = arith.constant 0 : index
      %30 = vector.load %arg4[%c0_16, %c0_17] : memref<32x32xf32, #tpu.memory_space<vmem>>, vector<32x32xf32>
      %cst_18 = arith.constant dense<0.000000e+00> : vector<128x32xf32>
      %31 = tpu.matmul %29, %30, %cst_18 {dimension_numbers = #tpu.dot_dimension_numbers<[1], [0], [0], [1], [0, 0, 1, 1], [], []>} : vector<128x32xf32>, vector<32x32xf32>, vector<128x32xf32> -> vector<128x32xf32>
      %c0_19 = arith.constant 0 : index
      %c0_20 = arith.constant 0 : index
      %32 = vector.load %arg5[%c0_19, %c0_20] : memref<1x32xf32, #tpu.memory_space<vmem>>, vector<1x32xf32>
      %33 = vector.broadcast %32 : vector<1x32xf32> to vector<128x32xf32>
      %34 = arith.addf %31, %33 : vector<128x32xf32>
      %c0_21 = arith.constant 0 : index
      %c0_22 = arith.constant 0 : index
      %35 = vector.load %arg6[%c0_21, %c0_22] : memref<128x32xf32, #tpu.memory_space<vmem>>, vector<128x32xf32>
      tpu.vector_store %arg6[%c0_21, %c0_22], %34 {strides = array<i32>} : memref<128x32xf32, #tpu.memory_space<vmem>>, vector<128x32xf32>,
    } else {
    }
    return
  }
  func.func @transform_0(%arg0: i32, %arg1: i32) -> (i32, i32) {
    %c0_i32 = arith.constant 0 : i32
    return %arg0, %arg1 : i32, i32
  }
  func.func @transform_1(%arg0: i32, %arg1: i32) -> (i32, i32) {
    %c0_i32 = arith.constant 0 : i32
    %c0_i32_0 = arith.constant 0 : i32
    return %arg1, %c0_i32 : i32, i32
  }
  func.func @transform_2(%arg0: i32, %arg1: i32) -> (i32, i32) {
    %c0_i32 = arith.constant 0 : i32
    %c0_i32_0 = arith.constant 0 : i32
    %c0_i32_1 = arith.constant 0 : i32
    return %c0_i32, %c0_i32_0 : i32, i32
  }
  func.func @transform_3(%arg0: i32, %arg1: i32) -> (i32, i32) {
    %c0_i32 = arith.constant 0 : i32
    %c0_i32_0 = arith.constant 0 : i32
    %c0_i32_1 = arith.constant 0 : i32
    return %c0_i32, %c0_i32_0 : i32, i32
  }
  func.func @transform_4(%arg0: i32, %arg1: i32) -> (i32, i32) {
    %c0_i32 = arith.constant 0 : i32
    %c0_i32_0 = arith.constant 0 : i32
    return %arg0, %c0_i32 : i32, i32
  }
}

</mosaic_0001>

<llo_original>
// kernel: tpu_custom_call.1
$region0: #{tpu_custom_call.1}
  #allocation0 [shape = 'u32[]', space=smem, size = 0x4, offset = 0x4, fixed_abs, tag = 'smem constant byte address 0x4 - core index']
  #allocation1 [shape = 'u32[144,128]{1,0:T(1,128)}', space=vmem, size = 0x12000, scoped, tag = 'internal scratch']
  #allocation2 [shape = 'f32[128,65]{1,0:T(8,128)}', space=vmem, size = 0x10000, scoped, tag = 'scratch operand']
  %s0 = inlined_call_operand.hbm [shape: bf16[256,256], index: 0, kind: input, shape index: {}]
  %s1 = inlined_call_operand.vmem [shape: bf16[256,65], index: 1, kind: input, shape index: {}]
  %s2 = inlined_call_operand.vmem [shape: f32[32,32], index: 2, kind: input, shape index: {}]
  %s3 = inlined_call_operand.vmem [shape: f32[1,32], index: 3, kind: input, shape index: {}]
  %s4 = inlined_call_operand.vmem [shape: f32[256,32], index: 4, kind: output, shape index: {}]
  %s5 = sld [smem:[#allocation0]]
  $region61: #{tpu_custom_call.1} parent=0
    _
  %s7 = ssub.s32 1, %s5
  %s8 = scalar_select 0, %s7, %s5
  $region1: #{tpu_custom_call.1} parent=0
    #allocation3 [shape = 'u8[65536]{0}', space=vmem, size = 0x10000, scoped, tag = 'input window, operand 0']
    #allocation4 [shape = 's32[2]{0}', space=sflag, size = 0x8, scoped, tag = 'scoped memory for tpu_custom_call.1']
    %9 = vsyncpa [#allocation4], 0
    %s10 = scalar_lea.sflag [#allocation4], 1
    %11 = vsyncpa %s10, 0
    loop: start=0, step=1, limit=6
    $region2: #{tpu_custom_call.1} parent=1 // loop_pre_header
      _
    $region3: #{tpu_custom_call.1} parent=1 // loop_header
      %s13 = sphi 0, %s17
      %p14 = scmp.ge.s32.totalorder %s13, 6
      %s20 = sphi 0, %s32
      %s21 = sphi 0, %s28
      %s22 = sphi 0, %s20
      %s23 = sphi 0, %s21
      %s24 = sphi 0, %s22
      %s25 = sphi 0, %s23
      %s37 = sphi 0, %s39
      %s40 = sphi 0, %s37
      %s41 = sphi 0, %s40
      %s57 = sphi 0, %s41
      %s63 = sphi 0, %s65
      %s66 = sphi 0, %s63
      %s67 = sphi 0, %s66
      %s83 = sphi 0, %s67
      %s87 = sphi 0, %s87
      %s89 = sphi 0, %s87
      %s90 = sphi 0, %s89
      %s104 = sphi 0, %s90
      %s108 = sphi 0, %s108
      %s110 = sphi 0, %s108
      %s111 = sphi 0, %s110
      %s125 = sphi 0, %s111
      %s131 = sphi 0, %s133
      %s134 = sphi 0, %s131
      %s135 = sphi 0, %s134
      %s151 = sphi 0, %s135
    $region4: #{tpu_custom_call.1} parent=1 // loop_header_branch
      %16 = sbr.rel (%p14) target = $region8
    $region5: #{tpu_custom_call.1} parent=1 // loop_body
      %s18 = ssub.s32 %s13, 1
      %s19 = ssub.s32 %s13, 2
      %s26 = sadd.s32 1, %s21
      %p27 = scmp.ge.s32.totalorder %s26, 2
      %s28 = scalar_select %p27, 0, %s26
      %s29 = sadd.s32 1, %s20
      %s30 = scalar_select %p27, %s29, %s20
      %p31 = scmp.ge.s32.totalorder %s30, 2
      %s32 = scalar_select %p31, 0, %s30
      %s33 = ssub.s32 %s20, %s32
      %s34 = ssub.s32 %s21, %s28
      %s35 = sor.u32 %s33, %s34
      %p36 = scmp.eq.s32.totalorder %s35, 0
      %s38 = sadd.s32 %s37, 1
      %s39 = scalar_select %p36, %s37, %s38
      %p42 = pneg %p36
      %p43 = scmp.eq.s32.totalorder %s13, 3
      %p44 = por %p42, %p43
      %p45 = scmp.ne.s32.totalorder %s37, %s40
      %p46 = scmp.eq.s32.totalorder %s13, 0
      %p47 = por %p45, %p46
      %p48 = scmp.ne.s32.totalorder %s37, %s40
      %p49 = scmp.eq.s32.totalorder %s18, 3
      %p50 = por %p48, %p49
      %p51 = scmp.ne.s32.totalorder %s40, %s41
      %p52 = scmp.eq.s32.totalorder %s18, 0
      %p53 = por %p51, %p52
      %p54 = scmp.ne.s32.totalorder %s40, %s41
      %p55 = scmp.eq.s32.totalorder %s19, 3
      %p56 = por %p54, %p55
      %p58 = scmp.ne.s32.totalorder %s41, %s57
      %p59 = scmp.eq.s32.totalorder %s19, 0
      %p60 = por %p58, %p59
      %s61 = ssub.s32 %s21, %s28
      %p62 = scmp.eq.s32.totalorder %s61, 0
      %s64 = sadd.s32 %s63, 1
      %s65 = scalar_select %p62, %s63, %s64
      %p68 = pneg %p62
      %p69 = scmp.eq.s32.totalorder %s13, 3
      %p70 = por %p68, %p69
      %p71 = scmp.ne.s32.totalorder %s63, %s66
      %p72 = scmp.eq.s32.totalorder %s13, 0
      %p73 = por %p71, %p72
      %p74 = scmp.ne.s32.totalorder %s63, %s66
      %p75 = scmp.eq.s32.totalorder %s18, 3
      %p76 = por %p74, %p75
      %p77 = scmp.ne.s32.totalorder %s66, %s67
      %p78 = scmp.eq.s32.totalorder %s18, 0
      %p79 = por %p77, %p78
      %p80 = scmp.ne.s32.totalorder %s66, %s67
      %p81 = scmp.eq.s32.totalorder %s19, 3
      %p82 = por %p80, %p81
      %p84 = scmp.ne.s32.totalorder %s67, %s83
      %p85 = scmp.eq.s32.totalorder %s19, 0
      %p86 = por %p84, %p85
      %s88 = sadd.s32 %s87, 1
      %p91 = scmp.eq.s32.totalorder %s13, 3
      %p92 = scmp.ne.s32.totalorder %s87, %s89
      %p93 = scmp.eq.s32.totalorder %s13, 0
      %p94 = por %p92, %p93
      %p95 = scmp.ne.s32.totalorder %s87, %s89
      %p96 = scmp.eq.s32.totalorder %s18, 3
      %p97 = por %p95, %p96
      %p98 = scmp.ne.s32.totalorder %s89, %s90
      %p99 = scmp.eq.s32.totalorder %s18, 0
      %p100 = por %p98, %p99
      %p101 = scmp.ne.s32.totalorder %s89, %s90
      %p102 = scmp.eq.s32.totalorder %s19, 3
      %p103 = por %p101, %p102
      %p105 = scmp.ne.s32.totalorder %s90, %s104
      %p106 = scmp.eq.s32.totalorder %s19, 0
      %p107 = por %p105, %p106
      %s109 = sadd.s32 %s108, 1
      %p112 = scmp.eq.s32.totalorder %s13, 3
      %p113 = scmp.ne.s32.totalorder %s108, %s110
      %p114 = scmp.eq.s32.totalorder %s13, 0
      %p115 = por %p113, %p114
      %p116 = scmp.ne.s32.totalorder %s108, %s110
      %p117 = scmp.eq.s32.totalorder %s18, 3
      %p118 = por %p116, %p117
      %p119 = scmp.ne.s32.totalorder %s110, %s111
      %p120 = scmp.eq.s32.totalorder %s18, 0
      %p121 = por %p119, %p120
      %p122 = scmp.ne.s32.totalorder %s110, %s111
      %p123 = scmp.eq.s32.totalorder %s19, 3
      %p124 = por %p122, %p123
      %p126 = scmp.ne.s32.totalorder %s111, %s125
      %p127 = scmp.eq.s32.totalorder %s19, 0
      %p128 = por %p126, %p127
      %s129 = ssub.s32 %s20, %s32
      %p130 = scmp.eq.s32.totalorder %s129, 0
      %s132 = sadd.s32 %s131, 1
      %s133 = scalar_select %p130, %s131, %s132
      %p136 = pneg %p130
      %p137 = scmp.eq.s32.totalorder %s13, 3
      %p138 = por %p136, %p137
      %p139 = scmp.ne.s32.totalorder %s131, %s134
      %p140 = scmp.eq.s32.totalorder %s13, 0
      %p141 = por %p139, %p140
      %p142 = scmp.ne.s32.totalorder %s131, %s134
      %p143 = scmp.eq.s32.totalorder %s18, 3
      %p144 = por %p142, %p143
      %p145 = scmp.ne.s32.totalorder %s134, %s135
      %p146 = scmp.eq.s32.totalorder %s18, 0
      %p147 = por %p145, %p146
      %p148 = scmp.ne.s32.totalorder %s134, %s135
      %p149 = scmp.eq.s32.totalorder %s19, 3
      %p150 = por %p148, %p149
      %p152 = scmp.ne.s32.totalorder %s135, %s151
      %p153 = scmp.eq.s32.totalorder %s19, 0
      %p154 = por %p152, %p153
      %p155 = scmp.le.s32.totalorder 1, %s13
      %p156 = scmp.lt.s32.totalorder %s13, 5
      %p157 = pnand %p155, %p156
      %p158 = pneg %p157
      // Predicated region
      $region9: #{tpu_custom_call.1} parent=5 // pred_check
        _
      $region10: #{tpu_custom_call.1} parent=5 // pred_check_branch
        %160 = sbr.rel (%p157) target = $region12
      $region11: #{tpu_custom_call.1} parent=5 // pred_region
        %s161 = ssub.s32 %s13, 1
        // Predicated region
        $region13: #{tpu_custom_call.1} parent=11 // pred_check
          %p162 = pneg %p100
        $region14: #{tpu_custom_call.1} parent=11 // pred_check_branch
          %164 = sbr.rel (%p162) target = $region16
        $region15: #{tpu_custom_call.1} parent=11 // pred_region
          _
        $region16: #{tpu_custom_call.1} parent=11 // pred_fallthru
          _
        // Predicated region
        $region17: #{tpu_custom_call.1} parent=11 // pred_check
          %p165 = pneg %p121
        $region18: #{tpu_custom_call.1} parent=11 // pred_check_branch
          %167 = sbr.rel (%p165) target = $region20
        $region19: #{tpu_custom_call.1} parent=11 // pred_region
          _
        $region20: #{tpu_custom_call.1} parent=11 // pred_fallthru
          _
      $region12: #{tpu_custom_call.1} parent=5 // pred_fallthru
        _
      %p168 = scmp.lt.s32.totalorder %s13, 4
      // Predicated region
      $region21: #{tpu_custom_call.1} parent=5 // pred_check
        %p169 = pneg %p168
      $region22: #{tpu_custom_call.1} parent=5 // pred_check_branch
        %171 = sbr.rel (%p169) target = $region24
      $region23: #{tpu_custom_call.1} parent=5 // pred_region
        // Predicated region
        $region25: #{tpu_custom_call.1} parent=23 // pred_check
          %p172 = pneg %p47
        $region26: #{tpu_custom_call.1} parent=23 // pred_check_branch
          %174 = sbr.rel (%p172) target = $region28
        $region27: #{tpu_custom_call.1} parent=23 // pred_region
          %s175 = sand.u32 %s37, 1
          %s176 = scalar_lea.sflag [#allocation4], %s175
          %s177 = sand.u32 %s37, 1
          %s178 = smul.addr %s177, 64
          %s179 = scalar_lea.vmem [#allocation3], %s178
          %s180 = smul.u32 16, %s20
          %s182 = ssub.s32 1024, 1024
          %183 = vsyncadd %s176, %s182
          %s184 = smul.addr %s180, 2
          %s185 = sadd.s32 %s21, %s184
          %s186 = smul.addr %s185, 64
          %s187 = scalar_lea.hbm %s0, %s186
          %s188 = sshll.u32 %s179, 4
          %s189 = int_to_ptr.vmem [resolvable:$true] %s188
          %194 = dma.hbm_to_vmem [thread:$0]  %s187, 1024, %s189, %s176, 128, 64, 4
        $region28: #{tpu_custom_call.1} parent=23 // pred_fallthru
          _
        // Predicated region
        $region29: #{tpu_custom_call.1} parent=23 // pred_check
          %p195 = pneg %p73
        $region30: #{tpu_custom_call.1} parent=23 // pred_check_branch
          %197 = sbr.rel (%p195) target = $region32
        $region31: #{tpu_custom_call.1} parent=23 // pred_region
          %s198 = smul.u32 16, %s21
          %p199 = scmp.lt.s32.totalorder %s198, 31
          %s200 = scalar_select %p199, %s198, 31
          %s201 = smul.addr %s200, 4
          %s202 = scalar_lea.vmem %s1, %s201
          %s203 = smul.u32 16, %s21
        $region32: #{tpu_custom_call.1} parent=23 // pred_fallthru
          _
      $region24: #{tpu_custom_call.1} parent=5 // pred_fallthru
        _
      %p204 = scmp.le.s32.totalorder 1, %s13
      %p205 = scmp.lt.s32.totalorder %s13, 5
      %p206 = pnand %p204, %p205
      %p207 = pneg %p206
      // Predicated region
      $region33: #{tpu_custom_call.1} parent=5 // pred_check
        _
      $region34: #{tpu_custom_call.1} parent=5 // pred_check_branch
        %209 = sbr.rel (%p206) target = $region36
      $region35: #{tpu_custom_call.1} parent=5 // pred_region
        %s210 = ssub.s32 %s13, 1
        %s211 = sand.u32 %s40, 1
        %s212 = scalar_lea.sflag [#allocation4], %s211
        %s213 = sand.u32 %s40, 1
        %s214 = smul.addr %s213, 64
        %s215 = scalar_lea.vmem [#allocation3], %s214
        // Predicated region
        $region37: #{tpu_custom_call.1} parent=35 // pred_check
          %p216 = pneg %p53
        $region38: #{tpu_custom_call.1} parent=35 // pred_check_branch
          %218 = sbr.rel (%p216) target = $region40
        $region39: #{tpu_custom_call.1} parent=35 // pred_region
          %219 = dma.done %s212, 1024
        $region40: #{tpu_custom_call.1} parent=35 // pred_fallthru
          _
        %s220 = sand.u32 %s40, 1
        %s221 = scalar_lea.sflag [#allocation4], %s220
        %s222 = sand.u32 %s40, 1
        %s223 = smul.addr %s222, 64
        %s224 = scalar_lea.vmem [#allocation3], %s223
        %p225 = pneg %p53
        %p226 = pneg %p50
        %s227 = smul.u32 16, %s23
        %p228 = scmp.lt.s32.totalorder %s227, 31
        %s229 = scalar_select %p228, %s227, 31
        %s230 = smul.addr %s229, 4
        %s231 = scalar_lea.vmem %s1, %s230
        %p232 = pneg %p79
        %p233 = pneg %p76
        %p234 = pneg %p100
        %p235 = pneg %p97
        %p236 = pneg %p121
        %p237 = pneg %p118
        %p238 = pneg %p147
        %p239 = pneg %p144
        %s240 = smul.u32 16, %s22
        %p241 = scmp.lt.s32.totalorder %s240, 31
        %s242 = scalar_select %p241, %s240, 31
        %s243 = smul.addr %s242, 8
        %s244 = scalar_lea.vmem %s4, %s243
        %s245 = smul.u32 16, %s22
        %s246 = smul.u32 16, %s23
        %p247 = scmp.lt.s32.totalorder %s246, 31
        %s248 = scalar_select %p247, %s246, 31
        %s249 = smul.addr %s248, 4
        %s250 = scalar_lea.vmem %s1, %s249
        %s251 = smul.u32 16, %s23
        %s252 = smul.u32 16, %s22
        %p253 = scmp.lt.s32.totalorder %s252, 31
        %s254 = scalar_select %p253, %s252, 31
        %s255 = smul.addr %s254, 8
        %s256 = scalar_lea.vmem %s4, %s255
        %s257 = smul.u32 16, %s22
        %p259 = scmp.eq.s32.totalorder %s23, 0
        // Predicated region
        $region41: #{tpu_custom_call.1} parent=35 // pred_check
          %p260 = pneg %p259
        $region42: #{tpu_custom_call.1} parent=35 // pred_check_branch
          %262 = sbr.rel (%p260) target = $region44
        $region43: #{tpu_custom_call.1} parent=35 // pred_region
          %vm263 = vcmask 531456
          %264 = vst.msk [vmem:[#allocation2] sm:$0xff] %vm263, 0.0
          %265 = vst.msk [vmem:[#allocation2 + $0x8] sm:$0xff] %vm263, 0.0
          %266 = vst.msk [vmem:[#allocation2 + $0x10] sm:$0xff] %vm263, 0.0
          %267 = vst.msk [vmem:[#allocation2 + $0x18] sm:$0xff] %vm263, 0.0
          %268 = vst.msk [vmem:[#allocation2 + $0x20] sm:$0xff] %vm263, 0.0
          %269 = vst.msk [vmem:[#allocation2 + $0x28] sm:$0xff] %vm263, 0.0
          %270 = vst.msk [vmem:[#allocation2 + $0x30] sm:$0xff] %vm263, 0.0
          %271 = vst.msk [vmem:[#allocation2 + $0x38] sm:$0xff] %vm263, 0.0
          %272 = vst.msk [vmem:[#allocation2 + $0x40] sm:$0xff] %vm263, 0.0
          %273 = vst.msk [vmem:[#allocation2 + $0x48] sm:$0xff] %vm263, 0.0
          %274 = vst.msk [vmem:[#allocation2 + $0x50] sm:$0xff] %vm263, 0.0
          %275 = vst.msk [vmem:[#allocation2 + $0x58] sm:$0xff] %vm263, 0.0
          %276 = vst.msk [vmem:[#allocation2 + $0x60] sm:$0xff] %vm263, 0.0
          %277 = vst.msk [vmem:[#allocation2 + $0x68] sm:$0xff] %vm263, 0.0
          %278 = vst.msk [vmem:[#allocation2 + $0x70] sm:$0xff] %vm263, 0.0
          %279 = vst.msk [vmem:[#allocation2 + $0x78] sm:$0xff] %vm263, 0.0
        $region44: #{tpu_custom_call.1} parent=35 // pred_fallthru
          _
        %v280 = vld [vmem:[#allocation2] sm:$0xff]
        %v281 = vld [vmem:[#allocation2 + $0x8] sm:$0xff]
        %v282 = vld [vmem:[#allocation2 + $0x10] sm:$0xff]
        %v283 = vld [vmem:[#allocation2 + $0x18] sm:$0xff]
        %v284 = vld [vmem:[#allocation2 + $0x20] sm:$0xff]
        %v285 = vld [vmem:[#allocation2 + $0x28] sm:$0xff]
        %v286 = vld [vmem:[#allocation2 + $0x30] sm:$0xff]
        %v287 = vld [vmem:[#allocation2 + $0x38] sm:$0xff]
        %v288 = vld [vmem:[#allocation2 + $0x40] sm:$0xff]
        %v289 = vld [vmem:[#allocation2 + $0x48] sm:$0xff]
        %v290 = vld [vmem:[#allocation2 + $0x50] sm:$0xff]
        %v291 = vld [vmem:[#allocation2 + $0x58] sm:$0xff]
        %v292 = vld [vmem:[#allocation2 + $0x60] sm:$0xff]
        %v293 = vld [vmem:[#allocation2 + $0x68] sm:$0xff]
        %v294 = vld [vmem:[#allocation2 + $0x70] sm:$0xff]
        %v295 = vld [vmem:[#allocation2 + $0x78] sm:$0xff]
        %v296 = vld [vmem:[%s215] sm:$0xf]
        %v297 = vld [vmem:[%s215 + $0x4] sm:$0xf]
        %v298 = vld [vmem:[%s215 + $0x8] sm:$0xf]
        %v299 = vld [vmem:[%s215 + $0xc] sm:$0xf]
        %v300 = vld [vmem:[%s215 + $0x10] sm:$0xf]
        %v301 = vld [vmem:[%s215 + $0x14] sm:$0xf]
        %v302 = vld [vmem:[%s215 + $0x18] sm:$0xf]
        %v303 = vld [vmem:[%s215 + $0x1c] sm:$0xf]
        %v304 = vld [vmem:[%s215 + $0x20] sm:$0xf]
        %v305 = vld [vmem:[%s215 + $0x24] sm:$0xf]
        %v306 = vld [vmem:[%s215 + $0x28] sm:$0xf]
        %v307 = vld [vmem:[%s215 + $0x2c] sm:$0xf]
        %v308 = vld [vmem:[%s215 + $0x30] sm:$0xf]
        %v309 = vld [vmem:[%s215 + $0x34] sm:$0xf]
        %v310 = vld [vmem:[%s215 + $0x38] sm:$0xf]
        %v311 = vld [vmem:[%s215 + $0x3c] sm:$0xf]
        %v312 = vld [vmem:[%s250] sm:$0xf]
        %v313 = vld [vmem:[%s250 + $0x4] sm:$0xf]
        %v314 = vld [vmem:[%s250 + $0x8] sm:$0xf]
        %v315 = vld [vmem:[%s250 + $0xc] sm:$0xf]
        %v316 = vld [vmem:[%s250 + $0x10] sm:$0xf]
        %v317 = vld [vmem:[%s250 + $0x14] sm:$0xf]
        %v318 = vld [vmem:[%s250 + $0x18] sm:$0xf]
        %v319 = vld [vmem:[%s250 + $0x1c] sm:$0xf]
        %v320 = vld [vmem:[%s250 + $0x20] sm:$0xf]
        %v321 = vld [vmem:[%s250 + $0x24] sm:$0xf]
        %v322 = vld [vmem:[%s250 + $0x28] sm:$0xf]
        %v323 = vld [vmem:[%s250 + $0x2c] sm:$0xf]
        %v324 = vld [vmem:[%s250 + $0x30] sm:$0xf]
        %v325 = vld [vmem:[%s250 + $0x34] sm:$0xf]
        %v326 = vld [vmem:[%s250 + $0x38] sm:$0xf]
        %v327 = vld [vmem:[%s250 + $0x3c] sm:$0xf]
        %v344 = vunpack.c.l.b16 %v296
        %v345 = vunpack.c.l.b16 %v297
        %v346 = vunpack.c.l.b16 %v298
        %v347 = vunpack.c.l.b16 %v299
        %v348 = vunpack.c.l.b16 %v300
        %v349 = vunpack.c.l.b16 %v301
        %v350 = vunpack.c.l.b16 %v302
        %v351 = vunpack.c.l.b16 %v303
        %v352 = vunpack.c.l.b16 %v304
        %v353 = vunpack.c.l.b16 %v305
        %v354 = vunpack.c.l.b16 %v306
        %v355 = vunpack.c.l.b16 %v307
        %v356 = vunpack.c.l.b16 %v308
        %v357 = vunpack.c.l.b16 %v309
        %v358 = vunpack.c.l.b16 %v310
        %v359 = vunpack.c.l.b16 %v311
        %v360 = vpack.c.b16 %v345, %v344
        %v361 = vpack.c.b16 %v347, %v346
        %v362 = vpack.c.b16 %v349, %v348
        %v363 = vpack.c.b16 %v351, %v350
        %v364 = vpack.c.b16 %v353, %v352
        %v365 = vpack.c.b16 %v355, %v354
        %v366 = vpack.c.b16 %v357, %v356
        %v367 = vpack.c.b16 %v359, %v358
        %v392 = vunpack.c.l.b16 %v312
        %v393 = vunpack.c.l.b16 %v313
        %v394 = vunpack.c.l.b16 %v314
        %v395 = vunpack.c.l.b16 %v315
        %v396 = vunpack.c.l.b16 %v316
        %v397 = vunpack.c.l.b16 %v317
        %v398 = vunpack.c.l.b16 %v318
        %v399 = vunpack.c.l.b16 %v319
        %v400 = vunpack.c.l.b16 %v320
        %v401 = vunpack.c.l.b16 %v321
        %v402 = vunpack.c.l.b16 %v322
        %v403 = vunpack.c.l.b16 %v323
        %v404 = vunpack.c.l.b16 %v324
        %v405 = vunpack.c.l.b16 %v325
        %v406 = vunpack.c.l.b16 %v326
        %v407 = vunpack.c.l.b16 %v327
        %v408 = vpack.c.b16 %v393, %v392
        %v409 = vpack.c.b16 %v395, %v394
        %v410 = vpack.c.b16 %v397, %v396
        %v411 = vpack.c.b16 %v399, %v398
        %v412 = vpack.c.b16 %v401, %v400
        %v413 = vpack.c.b16 %v403, %v402
        %v414 = vpack.c.b16 %v405, %v404
        %v415 = vpack.c.b16 %v407, %v406
        %424 = vmatprep.subr.bf16.mxu0 0
        %425 = vmatpush1.bf16.msra.mxu0 %v408
        %426 = vmatprep.subr.bf16.mxu0 0
        %427 = vmatpush1.bf16.msra.mxu0 %v409
        %428 = vmatprep.subr.bf16.mxu0 0
        %429 = vmatpush1.bf16.msra.mxu0 %v410
        %430 = vmatprep.subr.bf16.mxu0 0
        %431 = vmatpush1.bf16.msra.mxu0 %v411
        %432 = vmatprep.subr.bf16.mxu0 0
        %433 = vmatpush1.bf16.msra.mxu0 %v412
        %434 = vmatprep.subr.bf16.mxu0 0
        %435 = vmatpush1.bf16.msra.mxu0 %v413
        %436 = vmatprep.subr.bf16.mxu0 0
        %437 = vmatpush1.bf16.msra.mxu0 %v414
        %438 = vmatprep.subr.bf16.mxu0 0
        %439 = vmatpush1.bf16.msra.mxu0 %v415
        %440 = vmatprep.subr.bf16.mxu0 0
        %441 = vmatpush1.bf16.msra.mxu0 0
        %442 = vmatprep.subr.bf16.mxu0 0
        %443 = vmatpush1.bf16.msra.mxu0 0
        %444 = vmatprep.subr.bf16.mxu0 0
        %445 = vmatpush1.bf16.msra.mxu0 0
        %446 = vmatprep.subr.bf16.mxu0 0
        %447 = vmatpush1.bf16.msra.mxu0 0
        %448 = vmatprep.subr.bf16.mxu0 0
        %449 = vmatpush1.bf16.msra.mxu0 0
        %450 = vmatprep.subr.bf16.mxu0 0
        %451 = vmatpush1.bf16.msra.mxu0 0
        %452 = vmatprep.subr.bf16.mxu0 0
        %453 = vmatpush1.bf16.msra.mxu0 0
        %454 = vmatprep.subr.bf16.mxu0 0
        %455 = vmatpush1.bf16.msra.mxu0 0
        %456 = vmatprep.mubr.bf16.mxu0 0
        %457 = vmatmul.mubr.bf16.gmra.mrb[0].mxu0 %v360
        %v458 = vpop.f32.mrb[0].mxu0
        %v459 = vadd.f32 0.0, %v458
        %v460 = vpop.f32.mrb[0].mxu0
        %v461 = vpop.f32.mrb[0].mxu0
        %v462 = vadd.f32 0.0, %v461
        %v463 = vpop.f32.mrb[0].mxu0
        %464 = vmatprep.mubr.bf16.mxu0 0
        %465 = vmatmul.mubr.bf16.gmra.mrb[0].mxu0 %v361
        %v466 = vpop.f32.mrb[0].mxu0
        %v467 = vadd.f32 0.0, %v466
        %v468 = vpop.f32.mrb[0].mxu0
        %v469 = vpop.f32.mrb[0].mxu0
        %v470 = vadd.f32 0.0, %v469
        %v471 = vpop.f32.mrb[0].mxu0
        %472 = vmatprep.mubr.bf16.mxu0 0
        %473 = vmatmul.mubr.bf16.gmra.mrb[0].mxu0 %v362
        %v474 = vpop.f32.mrb[0].mxu0
        %v475 = vadd.f32 0.0, %v474
        %v476 = vpop.f32.mrb[0].mxu0
        %v477 = vpop.f32.mrb[0].mxu0
        %v478 = vadd.f32 0.0, %v477
        %v479 = vpop.f32.mrb[0].mxu0
        %480 = vmatprep.mubr.bf16.mxu0 0
        %481 = vmatmul.mubr.bf16.gmra.mrb[0].mxu0 %v363
        %v482 = vpop.f32.mrb[0].mxu0
        %v483 = vadd.f32 0.0, %v482
        %v484 = vpop.f32.mrb[0].mxu0
        %v485 = vpop.f32.mrb[0].mxu0
        %v486 = vadd.f32 0.0, %v485
        %v487 = vpop.f32.mrb[0].mxu0
        %488 = vmatprep.mubr.bf16.mxu0 0
        %489 = vmatmul.mubr.bf16.gmra.mrb[0].mxu0 %v364
        %v490 = vpop.f32.mrb[0].mxu0
        %v491 = vadd.f32 0.0, %v490
        %v492 = vpop.f32.mrb[0].mxu0
        %v493 = vpop.f32.mrb[0].mxu0
        %v494 = vadd.f32 0.0, %v493
        %v495 = vpop.f32.mrb[0].mxu0
        %496 = vmatprep.mubr.bf16.mxu0 0
        %497 = vmatmul.mubr.bf16.gmra.mrb[0].mxu0 %v365
        %v498 = vpop.f32.mrb[0].mxu0
        %v499 = vadd.f32 0.0, %v498
        %v500 = vpop.f32.mrb[0].mxu0
        %v501 = vpop.f32.mrb[0].mxu0
        %v502 = vadd.f32 0.0, %v501
        %v503 = vpop.f32.mrb[0].mxu0
        %504 = vmatprep.mubr.bf16.mxu0 0
        %505 = vmatmul.mubr.bf16.gmra.mrb[0].mxu0 %v366
        %v506 = vpop.f32.mrb[0].mxu0
        %v507 = vadd.f32 0.0, %v506
        %v508 = vpop.f32.mrb[0].mxu0
        %v509 = vpop.f32.mrb[0].mxu0
        %v510 = vadd.f32 0.0, %v509
        %v511 = vpop.f32.mrb[0].mxu0
        %512 = vmatprep.mubr.bf16.mxu0 0
        %513 = vmatmul.mubr.bf16.gmra.mrb[0].mxu0 %v367
        %v514 = vpop.f32.mrb[0].mxu0
        %v515 = vadd.f32 0.0, %v514
        %v516 = vpop.f32.mrb[0].mxu0
        %v517 = vpop.f32.mrb[0].mxu0
        %v518 = vadd.f32 0.0, %v517
        %v519 = vpop.f32.mrb[0].mxu0
        %520 = vdwg.mxu0
        %v521 = vadd.f32 %v280, %v459
        %v522 = vadd.f32 %v281, %v462
        %v523 = vadd.f32 %v282, %v467
        %v524 = vadd.f32 %v283, %v470
        %v525 = vadd.f32 %v284, %v475
        %v526 = vadd.f32 %v285, %v478
        %v527 = vadd.f32 %v286, %v483
        %v528 = vadd.f32 %v287, %v486
        %v529 = vadd.f32 %v288, %v491
        %v530 = vadd.f32 %v289, %v494
        %v531 = vadd.f32 %v290, %v499
        %v532 = vadd.f32 %v291, %v502
        %v533 = vadd.f32 %v292, %v507
        %v534 = vadd.f32 %v293, %v510
        %v535 = vadd.f32 %v294, %v515
        %v536 = vadd.f32 %v295, %v518
        %vm537 = vcmask 531456
        %538 = vst.msk [vmem:[#allocation2] sm:$0xff] %vm537, %v521
        %539 = vst.msk [vmem:[#allocation2 + $0x8] sm:$0xff] %vm537, %v522
        %540 = vst.msk [vmem:[#allocation2 + $0x10] sm:$0xff] %vm537, %v523
        %541 = vst.msk [vmem:[#allocation2 + $0x18] sm:$0xff] %vm537, %v524
        %542 = vst.msk [vmem:[#allocation2 + $0x20] sm:$0xff] %vm537, %v525
        %543 = vst.msk [vmem:[#allocation2 + $0x28] sm:$0xff] %vm537, %v526
        %544 = vst.msk [vmem:[#allocation2 + $0x30] sm:$0xff] %vm537, %v527
        %545 = vst.msk [vmem:[#allocation2 + $0x38] sm:$0xff] %vm537, %v528
        %546 = vst.msk [vmem:[#allocation2 + $0x40] sm:$0xff] %vm537, %v529
        %547 = vst.msk [vmem:[#allocation2 + $0x48] sm:$0xff] %vm537, %v530
        %548 = vst.msk [vmem:[#allocation2 + $0x50] sm:$0xff] %vm537, %v531
        %549 = vst.msk [vmem:[#allocation2 + $0x58] sm:$0xff] %vm537, %v532
        %550 = vst.msk [vmem:[#allocation2 + $0x60] sm:$0xff] %vm537, %v533
        %551 = vst.msk [vmem:[#allocation2 + $0x68] sm:$0xff] %vm537, %v534
        %552 = vst.msk [vmem:[#allocation2 + $0x70] sm:$0xff] %vm537, %v535
        %553 = vst.msk [vmem:[#allocation2 + $0x78] sm:$0xff] %vm537, %v536
        %p554 = scmp.eq.s32.totalorder %s23, 1
        // Predicated region
        $region45: #{tpu_custom_call.1} parent=35 // pred_check
          %p555 = pneg %p554
        $region46: #{tpu_custom_call.1} parent=35 // pred_check_branch
          %557 = sbr.rel (%p555) target = $region48
        $region47: #{tpu_custom_call.1} parent=35 // pred_region
          %v558 = vld [vmem:[#allocation2] sm:$0xff]
          %v559 = vld [vmem:[#allocation2 + $0x8] sm:$0xff]
          %v560 = vld [vmem:[#allocation2 + $0x10] sm:$0xff]
          %v561 = vld [vmem:[#allocation2 + $0x18] sm:$0xff]
          %v562 = vld [vmem:[#allocation2 + $0x20] sm:$0xff]
          %v563 = vld [vmem:[#allocation2 + $0x28] sm:$0xff]
          %v564 = vld [vmem:[#allocation2 + $0x30] sm:$0xff]
          %v565 = vld [vmem:[#allocation2 + $0x38] sm:$0xff]
          %v566 = vld [vmem:[#allocation2 + $0x40] sm:$0xff]
          %v567 = vld [vmem:[#allocation2 + $0x48] sm:$0xff]
          %v568 = vld [vmem:[#allocation2 + $0x50] sm:$0xff]
          %v569 = vld [vmem:[#allocation2 + $0x58] sm:$0xff]
          %v570 = vld [vmem:[#allocation2 + $0x60] sm:$0xff]
          %v571 = vld [vmem:[#allocation2 + $0x68] sm:$0xff]
          %v572 = vld [vmem:[#allocation2 + $0x70] sm:$0xff]
          %v573 = vld [vmem:[#allocation2 + $0x78] sm:$0xff]
          %575 = vset.pattern.permute.xlu0 64
          %576 = vperm.xlu0 %575, %v558
          %v577 = vpop.permute.xlu0 %576
          %580 = vset.pattern.permute.xlu0 64
          %581 = vperm.xlu0 %580, %v559
          %v582 = vpop.permute.xlu0 %581
          %585 = vset.pattern.permute.xlu0 64
          %586 = vperm.xlu0 %585, %v560
          %v587 = vpop.permute.xlu0 %586
          %590 = vset.pattern.permute.xlu0 64
          %591 = vperm.xlu0 %590, %v561
          %v592 = vpop.permute.xlu0 %591
          %595 = vset.pattern.permute.xlu0 64
          %596 = vperm.xlu0 %595, %v562
          %v597 = vpop.permute.xlu0 %596
          %600 = vset.pattern.permute.xlu0 64
          %601 = vperm.xlu0 %600, %v563
          %v602 = vpop.permute.xlu0 %601
          %605 = vset.pattern.permute.xlu0 64
          %606 = vperm.xlu0 %605, %v564
          %v607 = vpop.permute.xlu0 %606
          %610 = vset.pattern.permute.xlu0 64
          %611 = vperm.xlu0 %610, %v565
          %v612 = vpop.permute.xlu0 %611
          %615 = vset.pattern.permute.xlu0 64
          %616 = vperm.xlu0 %615, %v566
          %v617 = vpop.permute.xlu0 %616
          %620 = vset.pattern.permute.xlu0 64
          %621 = vperm.xlu0 %620, %v567
          %v622 = vpop.permute.xlu0 %621
          %625 = vset.pattern.permute.xlu0 64
          %626 = vperm.xlu0 %625, %v568
          %v627 = vpop.permute.xlu0 %626
          %630 = vset.pattern.permute.xlu0 64
          %631 = vperm.xlu0 %630, %v569
          %v632 = vpop.permute.xlu0 %631
          %635 = vset.pattern.permute.xlu0 64
          %636 = vperm.xlu0 %635, %v570
          %v637 = vpop.permute.xlu0 %636
          %640 = vset.pattern.permute.xlu0 64
          %641 = vperm.xlu0 %640, %v571
          %v642 = vpop.permute.xlu0 %641
          %645 = vset.pattern.permute.xlu0 64
          %646 = vperm.xlu0 %645, %v572
          %v647 = vpop.permute.xlu0 %646
          %650 = vset.pattern.permute.xlu0 64
          %651 = vperm.xlu0 %650, %v573
          %v652 = vpop.permute.xlu0 %651
          %v654 = vmul.f32 %v577, %v558
          %v655 = vmul.f32 %v582, %v559
          %v656 = vmul.f32 %v587, %v560
          %v657 = vmul.f32 %v592, %v561
          %v658 = vmul.f32 %v597, %v562
          %v659 = vmul.f32 %v602, %v563
          %v660 = vmul.f32 %v607, %v564
          %v661 = vmul.f32 %v612, %v565
          %v662 = vmul.f32 %v617, %v566
          %v663 = vmul.f32 %v622, %v567
          %v664 = vmul.f32 %v627, %v568
          %v665 = vmul.f32 %v632, %v569
          %v666 = vmul.f32 %v637, %v570
          %v667 = vmul.f32 %v642, %v571
          %v668 = vmul.f32 %v647, %v572
          %v669 = vmul.f32 %v652, %v573
          %670 = vrot.lane.b32.xlu0 %v558, 32
          %v671 = vpop.permute.xlu0 %670
          %672 = vrot.lane.b32.xlu0 %v559, 32
          %v673 = vpop.permute.xlu0 %672
          %674 = vrot.lane.b32.xlu0 %v560, 32
          %v675 = vpop.permute.xlu0 %674
          %676 = vrot.lane.b32.xlu0 %v561, 32
          %v677 = vpop.permute.xlu0 %676
          %678 = vrot.lane.b32.xlu0 %v562, 32
          %v679 = vpop.permute.xlu0 %678
          %680 = vrot.lane.b32.xlu0 %v563, 32
          %v681 = vpop.permute.xlu0 %680
          %682 = vrot.lane.b32.xlu0 %v564, 32
          %v683 = vpop.permute.xlu0 %682
          %684 = vrot.lane.b32.xlu0 %v565, 32
          %v685 = vpop.permute.xlu0 %684
          %686 = vrot.lane.b32.xlu0 %v566, 32
          %v687 = vpop.permute.xlu0 %686
          %688 = vrot.lane.b32.xlu0 %v567, 32
          %v689 = vpop.permute.xlu0 %688
          %690 = vrot.lane.b32.xlu0 %v568, 32
          %v691 = vpop.permute.xlu0 %690
          %692 = vrot.lane.b32.xlu0 %v569, 32
          %v693 = vpop.permute.xlu0 %692
          %694 = vrot.lane.b32.xlu0 %v570, 32
          %v695 = vpop.permute.xlu0 %694
          %696 = vrot.lane.b32.xlu0 %v571, 32
          %v697 = vpop.permute.xlu0 %696
          %698 = vrot.lane.b32.xlu0 %v572, 32
          %v699 = vpop.permute.xlu0 %698
          %700 = vrot.lane.b32.xlu0 %v573, 32
          %v701 = vpop.permute.xlu0 %700
          %v718 = vrcp.pop %v671
          %v719 = vmul.f32 %v654, %v718
          %v720 = vrcp.pop %v673
          %v721 = vmul.f32 %v655, %v720
          %v722 = vrcp.pop %v675
          %v723 = vmul.f32 %v656, %v722
          %v724 = vrcp.pop %v677
          %v725 = vmul.f32 %v657, %v724
          %v726 = vrcp.pop %v679
          %v727 = vmul.f32 %v658, %v726
          %v728 = vrcp.pop %v681
          %v729 = vmul.f32 %v659, %v728
          %v730 = vrcp.pop %v683
          %v731 = vmul.f32 %v660, %v730
          %v732 = vrcp.pop %v685
          %v733 = vmul.f32 %v661, %v732
          %v734 = vrcp.pop %v687
          %v735 = vmul.f32 %v662, %v734
          %v736 = vrcp.pop %v689
          %v737 = vmul.f32 %v663, %v736
          %v738 = vrcp.pop %v691
          %v739 = vmul.f32 %v664, %v738
          %v740 = vrcp.pop %v693
          %v741 = vmul.f32 %v665, %v740
          %v742 = vrcp.pop %v695
          %v743 = vmul.f32 %v666, %v742
          %v744 = vrcp.pop %v697
          %v745 = vmul.f32 %v667, %v744
          %v746 = vrcp.pop %v699
          %v747 = vmul.f32 %v668, %v746
          %v748 = vrcp.pop %v701
          %v749 = vmul.f32 %v669, %v748
          %vm750 = vcmp.ne.f32.partialorder %v719, %v719
          %vm751 = vcmp.ne.f32.partialorder %v721, %v721
          %vm752 = vcmp.ne.f32.partialorder %v723, %v723
          %vm753 = vcmp.ne.f32.partialorder %v725, %v725
          %vm754 = vcmp.ne.f32.partialorder %v727, %v727
          %vm755 = vcmp.ne.f32.partialorder %v729, %v729
          %vm756 = vcmp.ne.f32.partialorder %v731, %v731
          %vm757 = vcmp.ne.f32.partialorder %v733, %v733
          %vm758 = vcmp.ne.f32.partialorder %v735, %v735
          %vm759 = vcmp.ne.f32.partialorder %v737, %v737
          %vm760 = vcmp.ne.f32.partialorder %v739, %v739
          %vm761 = vcmp.ne.f32.partialorder %v741, %v741
          %vm762 = vcmp.ne.f32.partialorder %v743, %v743
          %vm763 = vcmp.ne.f32.partialorder %v745, %v745
          %vm764 = vcmp.ne.f32.partialorder %v747, %v747
          %vm765 = vcmp.ne.f32.partialorder %v749, %v749
          %v766 = vsel %vm750, 0.0, %v719
          %v767 = vsel %vm751, 0.0, %v721
          %v768 = vsel %vm752, 0.0, %v723
          %v769 = vsel %vm753, 0.0, %v725
          %v770 = vsel %vm754, 0.0, %v727
          %v771 = vsel %vm755, 0.0, %v729
          %v772 = vsel %vm756, 0.0, %v731
          %v773 = vsel %vm757, 0.0, %v733
          %v774 = vsel %vm758, 0.0, %v735
          %v775 = vsel %vm759, 0.0, %v737
          %v776 = vsel %vm760, 0.0, %v739
          %v777 = vsel %vm761, 0.0, %v741
          %v778 = vsel %vm762, 0.0, %v743
          %v779 = vsel %vm763, 0.0, %v745
          %v780 = vsel %vm764, 0.0, %v747
          %v781 = vsel %vm765, 0.0, %v749
          %vm782 = vcmp.eq.f32.partialorder %v766, inf
          %vm783 = vcmp.eq.f32.partialorder %v767, inf
          %vm784 = vcmp.eq.f32.partialorder %v768, inf
          %vm785 = vcmp.eq.f32.partialorder %v769, inf
          %vm786 = vcmp.eq.f32.partialorder %v770, inf
          %vm787 = vcmp.eq.f32.partialorder %v771, inf
          %vm788 = vcmp.eq.f32.partialorder %v772, inf
          %vm789 = vcmp.eq.f32.partialorder %v773, inf
          %vm790 = vcmp.eq.f32.partialorder %v774, inf
          %vm791 = vcmp.eq.f32.partialorder %v775, inf
          %vm792 = vcmp.eq.f32.partialorder %v776, inf
          %vm793 = vcmp.eq.f32.partialorder %v777, inf
          %vm794 = vcmp.eq.f32.partialorder %v778, inf
          %vm795 = vcmp.eq.f32.partialorder %v779, inf
          %vm796 = vcmp.eq.f32.partialorder %v780, inf
          %vm797 = vcmp.eq.f32.partialorder %v781, inf
          %v798 = vsel %vm782, 3.4028235e+38, %v766
          %v799 = vsel %vm783, 3.4028235e+38, %v767
          %v800 = vsel %vm784, 3.4028235e+38, %v768
          %v801 = vsel %vm785, 3.4028235e+38, %v769
          %v802 = vsel %vm786, 3.4028235e+38, %v770
          %v803 = vsel %vm787, 3.4028235e+38, %v771
          %v804 = vsel %vm788, 3.4028235e+38, %v772
          %v805 = vsel %vm789, 3.4028235e+38, %v773
          %v806 = vsel %vm790, 3.4028235e+38, %v774
          %v807 = vsel %vm791, 3.4028235e+38, %v775
          %v808 = vsel %vm792, 3.4028235e+38, %v776
          %v809 = vsel %vm793, 3.4028235e+38, %v777
          %v810 = vsel %vm794, 3.4028235e+38, %v778
          %v811 = vsel %vm795, 3.4028235e+38, %v779
          %v812 = vsel %vm796, 3.4028235e+38, %v780
          %v813 = vsel %vm797, 3.4028235e+38, %v781
          %vm814 = vcmp.eq.f32.partialorder %v798, -inf
          %vm815 = vcmp.eq.f32.partialorder %v799, -inf
          %vm816 = vcmp.eq.f32.partialorder %v800, -inf
          %vm817 = vcmp.eq.f32.partialorder %v801, -inf
          %vm818 = vcmp.eq.f32.partialorder %v802, -inf
          %vm819 = vcmp.eq.f32.partialorder %v803, -inf
          %vm820 = vcmp.eq.f32.partialorder %v804, -inf
          %vm821 = vcmp.eq.f32.partialorder %v805, -inf
          %vm822 = vcmp.eq.f32.partialorder %v806, -inf
          %vm823 = vcmp.eq.f32.partialorder %v807, -inf
          %vm824 = vcmp.eq.f32.partialorder %v808, -inf
          %vm825 = vcmp.eq.f32.partialorder %v809, -inf
          %vm826 = vcmp.eq.f32.partialorder %v810, -inf
          %vm827 = vcmp.eq.f32.partialorder %v811, -inf
          %vm828 = vcmp.eq.f32.partialorder %v812, -inf
          %vm829 = vcmp.eq.f32.partialorder %v813, -inf
          %v830 = vsel %vm814, -3.4028235e+38, %v798
          %v831 = vsel %vm815, -3.4028235e+38, %v799
          %v832 = vsel %vm816, -3.4028235e+38, %v800
          %v833 = vsel %vm817, -3.4028235e+38, %v801
          %v834 = vsel %vm818, -3.4028235e+38, %v802
          %v835 = vsel %vm819, -3.4028235e+38, %v803
          %v836 = vsel %vm820, -3.4028235e+38, %v804
          %v837 = vsel %vm821, -3.4028235e+38, %v805
          %v838 = vsel %vm822, -3.4028235e+38, %v806
          %v839 = vsel %vm823, -3.4028235e+38, %v807
          %v840 = vsel %vm824, -3.4028235e+38, %v808
          %v841 = vsel %vm825, -3.4028235e+38, %v809
          %v842 = vsel %vm826, -3.4028235e+38, %v810
          %v843 = vsel %vm827, -3.4028235e+38, %v811
          %v844 = vsel %vm828, -3.4028235e+38, %v812
          %v845 = vsel %vm829, -3.4028235e+38, %v813
          %v846 = vld [vmem:[%s2] sm:$0xff]
          %v847 = vld [vmem:[%s2 + $0x8] sm:$0xff]
          %v848 = vld [vmem:[%s2 + $0x10] sm:$0xff]
          %v849 = vld [vmem:[%s2 + $0x18] sm:$0xff]
          %v850 = vld [vmem:[%s3] sm:$0x1]
          %v852 = vlaneseq
          %v853 = vshrl.u32 %v852, 7
          %v854 = vsub.s32 0, %v853
          %v855 = vrot.slane %v850, %v854
          %873 = vrot.lane.b32.xlu0 %v830, 96
          %v874 = vpop.permute.xlu0 %873
          %875 = vrot.lane.b32.xlu0 %v831, 96
          %v876 = vpop.permute.xlu0 %875
          %877 = vrot.lane.b32.xlu0 %v832, 96
          %v878 = vpop.permute.xlu0 %877
          %879 = vrot.lane.b32.xlu0 %v833, 96
          %v880 = vpop.permute.xlu0 %879
          %881 = vrot.lane.b32.xlu0 %v834, 96
          %v882 = vpop.permute.xlu0 %881
          %883 = vrot.lane.b32.xlu0 %v835, 96
          %v884 = vpop.permute.xlu0 %883
          %885 = vrot.lane.b32.xlu0 %v836, 96
          %v886 = vpop.permute.xlu0 %885
          %887 = vrot.lane.b32.xlu0 %v837, 96
          %v888 = vpop.permute.xlu0 %887
          %889 = vrot.lane.b32.xlu0 %v838, 96
          %v890 = vpop.permute.xlu0 %889
          %891 = vrot.lane.b32.xlu0 %v839, 96
          %v892 = vpop.permute.xlu0 %891
          %893 = vrot.lane.b32.xlu0 %v840, 96
          %v894 = vpop.permute.xlu0 %893
          %895 = vrot.lane.b32.xlu0 %v841, 96
          %v896 = vpop.permute.xlu0 %895
          %897 = vrot.lane.b32.xlu0 %v842, 96
          %v898 = vpop.permute.xlu0 %897
          %899 = vrot.lane.b32.xlu0 %v843, 96
          %v900 = vpop.permute.xlu0 %899
          %901 = vrot.lane.b32.xlu0 %v844, 96
          %v902 = vpop.permute.xlu0 %901
          %903 = vrot.lane.b32.xlu0 %v845, 96
          %v904 = vpop.permute.xlu0 %903
          %vm905 = vcmask 261120
          %v906 = vsel %vm905, %v874, 0
          %v908 = vsel %vm905, %v876, 0
          %v910 = vsel %vm905, %v878, 0
          %v912 = vsel %vm905, %v880, 0
          %v914 = vsel %vm905, %v882, 0
          %v916 = vsel %vm905, %v884, 0
          %v918 = vsel %vm905, %v886, 0
          %v920 = vsel %vm905, %v888, 0
          %v922 = vsel %vm905, %v890, 0
          %v924 = vsel %vm905, %v892, 0
          %v926 = vsel %vm905, %v894, 0
          %v928 = vsel %vm905, %v896, 0
          %v930 = vsel %vm905, %v898, 0
          %v932 = vsel %vm905, %v900, 0
          %v934 = vsel %vm905, %v902, 0
          %v936 = vsel %vm905, %v904, 0
          %938 = vmatprep.subr.mxu0 0.0
          %939 = vmatpush1.msra.mxu0 %v846
          %940 = vmatprep.subr.mxu0 0.0
          %941 = vmatpush1.msra.mxu0 %v847
          %942 = vmatprep.subr.mxu0 0.0
          %943 = vmatpush1.msra.mxu0 %v848
          %944 = vmatprep.subr.mxu0 0.0
          %945 = vmatpush1.msra.mxu0 %v849
          %946 = vmatprep.subr.mxu0 0.0
          %947 = vmatpush1.msra.mxu0 0.0
          %948 = vmatprep.subr.mxu0 0.0
          %949 = vmatpush1.msra.mxu0 0.0
          %950 = vmatprep.subr.mxu0 0.0
          %951 = vmatpush1.msra.mxu0 0.0
          %952 = vmatprep.subr.mxu0 0.0
          %953 = vmatpush1.msra.mxu0 0.0
          %954 = vmatprep.subr.mxu0 0.0
          %955 = vmatpush1.msra.mxu0 0.0
          %956 = vmatprep.subr.mxu0 0.0
          %957 = vmatpush1.msra.mxu0 0.0
          %958 = vmatprep.subr.mxu0 0.0
          %959 = vmatpush1.msra.mxu0 0.0
          %960 = vmatprep.subr.mxu0 0.0
          %961 = vmatpush1.msra.mxu0 0.0
          %962 = vmatprep.subr.mxu0 0.0
          %963 = vmatpush1.msra.mxu0 0.0
          %964 = vmatprep.subr.mxu0 0.0
          %965 = vmatpush1.msra.mxu0 0.0
          %966 = vmatprep.subr.mxu0 0.0
          %967 = vmatpush1.msra.mxu0 0.0
          %968 = vmatprep.subr.mxu0 0.0
          %969 = vmatpush1.msra.mxu0 0.0
          %970 = vmatprep.subr.mxu0 0.0
          %971 = vmatpush1.msra.mxu0 0.0
          %972 = vmatprep.subr.mxu0 0.0
          %973 = vmatpush1.msra.mxu0 0.0
          %974 = vmatprep.subr.mxu0 0.0
          %975 = vmatpush1.msra.mxu0 0.0
          %976 = vmatprep.subr.mxu0 0.0
          %977 = vmatpush1.msra.mxu0 0.0
          %978 = vmatprep.subr.mxu0 0.0
          %979 = vmatpush1.msra.mxu0 0.0
          %980 = vmatprep.subr.mxu0 0.0
          %981 = vmatpush1.msra.mxu0 0.0
          %982 = vmatprep.subr.mxu0 0.0
          %983 = vmatpush1.msra.mxu0 0.0
          %984 = vmatprep.subr.mxu0 0.0
          %985 = vmatpush1.msra.mxu0 0.0
          %986 = vmatprep.subr.mxu0 0.0
          %987 = vmatpush1.msra.mxu0 0.0
          %988 = vmatprep.subr.mxu0 0.0
          %989 = vmatpush1.msra.mxu0 0.0
          %990 = vmatprep.subr.mxu0 0.0
          %991 = vmatpush1.msra.mxu0 0.0
          %992 = vmatprep.subr.mxu0 0.0
          %993 = vmatpush1.msra.mxu0 0.0
          %994 = vmatprep.subr.mxu0 0.0
          %995 = vmatpush1.msra.mxu0 0.0
          %996 = vmatprep.subr.mxu0 0.0
          %997 = vmatpush1.msra.mxu0 0.0
          %998 = vmatprep.subr.mxu0 0.0
          %999 = vmatpush1.msra.mxu0 0.0
          %1000 = vmatprep.subr.mxu0 0.0
          %1001 = vmatpush1.msra.mxu0 0.0
          %1002 = vmatprep.mubr.f32.mxu0 0.0
          %1003 = vmatmul.mubr.f32.gmra.mrb[0].mxu0 %v906
          %v1004 = vpop.f32.mrb[0].mxu0
          %v1005 = vadd.f32 %v855, %v1004
          %v1006 = vpop.f32.mrb[0].mxu0
          %1007 = vmatprep.mubr.f32.mxu0 0.0
          %1008 = vmatmul.mubr.f32.gmra.mrb[0].mxu0 %v908
          %v1009 = vpop.f32.mrb[0].mxu0
          %v1010 = vadd.f32 %v855, %v1009
          %v1011 = vpop.f32.mrb[0].mxu0
          %1012 = vmatprep.mubr.f32.mxu0 0.0
          %1013 = vmatmul.mubr.f32.gmra.mrb[0].mxu0 %v910
          %v1014 = vpop.f32.mrb[0].mxu0
          %v1015 = vadd.f32 %v855, %v1014
          %v1016 = vpop.f32.mrb[0].mxu0
          %1017 = vmatprep.mubr.f32.mxu0 0.0
          %1018 = vmatmul.mubr.f32.gmra.mrb[0].mxu0 %v912
          %v1019 = vpop.f32.mrb[0].mxu0
          %v1020 = vadd.f32 %v855, %v1019
          %v1021 = vpop.f32.mrb[0].mxu0
          %1022 = vmatprep.mubr.f32.mxu0 0.0
          %1023 = vmatmul.mubr.f32.gmra.mrb[0].mxu0 %v914
          %v1024 = vpop.f32.mrb[0].mxu0
          %v1025 = vadd.f32 %v855, %v1024
          %v1026 = vpop.f32.mrb[0].mxu0
          %1027 = vmatprep.mubr.f32.mxu0 0.0
          %1028 = vmatmul.mubr.f32.gmra.mrb[0].mxu0 %v916
          %v1029 = vpop.f32.mrb[0].mxu0
          %v1030 = vadd.f32 %v855, %v1029
          %v1031 = vpop.f32.mrb[0].mxu0
          %1032 = vmatprep.mubr.f32.mxu0 0.0
          %1033 = vmatmul.mubr.f32.gmra.mrb[0].mxu0 %v918
          %v1034 = vpop.f32.mrb[0].mxu0
          %v1035 = vadd.f32 %v855, %v1034
          %v1036 = vpop.f32.mrb[0].mxu0
          %1037 = vmatprep.mubr.f32.mxu0 0.0
          %1038 = vmatmul.mubr.f32.gmra.mrb[0].mxu0 %v920
          %v1039 = vpop.f32.mrb[0].mxu0
          %v1040 = vadd.f32 %v855, %v1039
          %v1041 = vpop.f32.mrb[0].mxu0
          %1042 = vmatprep.mubr.f32.mxu0 0.0
          %1043 = vmatmul.mubr.f32.gmra.mrb[0].mxu0 %v922
          %v1044 = vpop.f32.mrb[0].mxu0
          %v1045 = vadd.f32 %v855, %v1044
          %v1046 = vpop.f32.mrb[0].mxu0
          %1047 = vmatprep.mubr.f32.mxu0 0.0
          %1048 = vmatmul.mubr.f32.gmra.mrb[0].mxu0 %v924
          %v1049 = vpop.f32.mrb[0].mxu0
          %v1050 = vadd.f32 %v855, %v1049
          %v1051 = vpop.f32.mrb[0].mxu0
          %1052 = vmatprep.mubr.f32.mxu0 0.0
          %1053 = vmatmul.mubr.f32.gmra.mrb[0].mxu0 %v926
          %v1054 = vpop.f32.mrb[0].mxu0
          %v1055 = vadd.f32 %v855, %v1054
          %v1056 = vpop.f32.mrb[0].mxu0
          %1057 = vmatprep.mubr.f32.mxu0 0.0
          %1058 = vmatmul.mubr.f32.gmra.mrb[0].mxu0 %v928
          %v1059 = vpop.f32.mrb[0].mxu0
          %v1060 = vadd.f32 %v855, %v1059
          %v1061 = vpop.f32.mrb[0].mxu0
          %1062 = vmatprep.mubr.f32.mxu0 0.0
          %1063 = vmatmul.mubr.f32.gmra.mrb[0].mxu0 %v930
          %v1064 = vpop.f32.mrb[0].mxu0
          %v1065 = vadd.f32 %v855, %v1064
          %v1066 = vpop.f32.mrb[0].mxu0
          %1067 = vmatprep.mubr.f32.mxu0 0.0
          %1068 = vmatmul.mubr.f32.gmra.mrb[0].mxu0 %v932
          %v1069 = vpop.f32.mrb[0].mxu0
          %v1070 = vadd.f32 %v855, %v1069
          %v1071 = vpop.f32.mrb[0].mxu0
          %1072 = vmatprep.mubr.f32.mxu0 0.0
          %1073 = vmatmul.mubr.f32.gmra.mrb[0].mxu0 %v934
          %v1074 = vpop.f32.mrb[0].mxu0
          %v1075 = vadd.f32 %v855, %v1074
          %v1076 = vpop.f32.mrb[0].mxu0
          %1077 = vmatprep.mubr.f32.mxu0 0.0
          %1078 = vmatmul.mubr.f32.gmra.mrb[0].mxu0 %v936
          %v1079 = vpop.f32.mrb[0].mxu0
          %v1080 = vadd.f32 %v855, %v1079
          %v1081 = vpop.f32.mrb[0].mxu0
          %1082 = vdwg.mxu0
          %1083 = vst.msk [vmem:[%s256] sm:$0xff] %vm905, %v1005
          %1084 = vst.msk [vmem:[%s256 + $0x8] sm:$0xff] %vm905, %v1010
          %1085 = vst.msk [vmem:[%s256 + $0x10] sm:$0xff] %vm905, %v1015
          %1086 = vst.msk [vmem:[%s256 + $0x18] sm:$0xff] %vm905, %v1020
          %1087 = vst.msk [vmem:[%s256 + $0x20] sm:$0xff] %vm905, %v1025
          %1088 = vst.msk [vmem:[%s256 + $0x28] sm:$0xff] %vm905, %v1030
          %1089 = vst.msk [vmem:[%s256 + $0x30] sm:$0xff] %vm905, %v1035
          %1090 = vst.msk [vmem:[%s256 + $0x38] sm:$0xff] %vm905, %v1040
          %1091 = vst.msk [vmem:[%s256 + $0x40] sm:$0xff] %vm905, %v1045
          %1092 = vst.msk [vmem:[%s256 + $0x48] sm:$0xff] %vm905, %v1050
          %1093 = vst.msk [vmem:[%s256 + $0x50] sm:$0xff] %vm905, %v1055
          %1094 = vst.msk [vmem:[%s256 + $0x58] sm:$0xff] %vm905, %v1060
          %1095 = vst.msk [vmem:[%s256 + $0x60] sm:$0xff] %vm905, %v1065
          %1096 = vst.msk [vmem:[%s256 + $0x68] sm:$0xff] %vm905, %v1070
          %1097 = vst.msk [vmem:[%s256 + $0x70] sm:$0xff] %vm905, %v1075
          %1098 = vst.msk [vmem:[%s256 + $0x78] sm:$0xff] %vm905, %v1080
        $region48: #{tpu_custom_call.1} parent=35 // pred_fallthru
          _
        %s1099 = smul.u32 16, %s22
        %p1100 = scmp.lt.s32.totalorder %s1099, 31
        %s1101 = scalar_select %p1100, %s1099, 31
        %s1102 = smul.addr %s1101, 8
        %s1103 = scalar_lea.vmem %s4, %s1102
        // Predicated region
        $region49: #{tpu_custom_call.1} parent=35 // pred_check
          %p1104 = pneg %p144
        $region50: #{tpu_custom_call.1} parent=35 // pred_check_branch
          %1106 = sbr.rel (%p1104) target = $region52
        $region51: #{tpu_custom_call.1} parent=35 // pred_region
          %s1107 = smul.u32 16, %s22
        $region52: #{tpu_custom_call.1} parent=35 // pred_fallthru
          _
      $region36: #{tpu_custom_call.1} parent=5 // pred_fallthru
        _
      %p1108 = scmp.le.s32.totalorder 2, %s13
      // Predicated region
      $region53: #{tpu_custom_call.1} parent=5 // pred_check
        %p1109 = pneg %p1108
      $region54: #{tpu_custom_call.1} parent=5 // pred_check_branch
        %1111 = sbr.rel (%p1109) target = $region56
      $region55: #{tpu_custom_call.1} parent=5 // pred_region
        %s1112 = ssub.s32 %s13, 2
        // Predicated region
        $region57: #{tpu_custom_call.1} parent=55 // pred_check
          %p1113 = pneg %p150
        $region58: #{tpu_custom_call.1} parent=55 // pred_check_branch
          %1115 = sbr.rel (%p1113) target = $region60
        $region59: #{tpu_custom_call.1} parent=55 // pred_region
          %s1116 = smul.u32 16, %s24
          %p1117 = scmp.lt.s32.totalorder %s1116, 31
          %s1118 = scalar_select %p1117, %s1116, 31
          %s1119 = smul.addr %s1118, 8
          %s1120 = scalar_lea.vmem %s4, %s1119
        $region60: #{tpu_custom_call.1} parent=55 // pred_fallthru
          _
      $region56: #{tpu_custom_call.1} parent=5 // pred_fallthru
        _
    $region6: #{tpu_custom_call.1} parent=1 // loop_footer
      %s17 = sadd.s32 1, %s13
    $region7: #{tpu_custom_call.1} parent=1 // loop_footer_branch
      %12 = sbr.rel target = $region3
    $region8: #{tpu_custom_call.1} parent=1 // loop_exit
      _
    %1121 = vsyncpa [#allocation4], 1
    %s1122 = scalar_lea.sflag [#allocation4], 1
    %1123 = vsyncpa %s1122, 1

</llo_original>
